<compile_context>
chip_gen: v5e
topology: v5e:2x2
jax: 0.10.0
libtpu: 0.0.40
codegen_flags: <defaults>
</compile_context>

<pallas_src>
import functools

import jax
import jax.numpy as jnp
from jax.experimental import pallas as pl
from jax.experimental.pallas import tpu as pltpu


def _iou_kernel(pred_ref, target_ref, iou_ref, *, lane_width):
    """Per-lane line-IoU for one (tile_l, Nr) block (single pass, no grid-k).

    Uses min(p+w, t+w) - max(p-w, t-w) = 2w - |p-t| and union = 2w + |p-t|,
    so both masked row sums derive from a single |p-t| stream + valid count.
    """
    lw2 = 2.0 * float(lane_width)      # plain python float -> inlined literal

    p = pred_ref[...]
    t = target_ref[...]

    # Elementwise stage stays in the native input dtype (bf16 on v6e/v7x VPU,
    # f32 otherwise); accumulation below widens to f32.
    d = jnp.abs(p - t)
    mask = jnp.logical_and(t >= 0, t < 1).astype(p.dtype)

    d_sum = jnp.sum((d * mask).astype(jnp.float32), axis=-1, keepdims=True)
    n_valid = jnp.sum(mask.astype(jnp.float32), axis=-1, keepdims=True)

    ovr = lw2 * n_valid - d_sum        # sum over valid of (2w - |p-t|)
    union = lw2 * n_valid + d_sum      # sum over valid of (2w + |p-t|)
    iou_ref[...] = ovr / (union + 1e-9)


def _round_up(x, m):
    return ((x + m - 1) // m) * m


def _choose_tiling(nl, nr, itemsize, *, target_steps=8, max_block_bytes=512 * 1024):
    """Pick (tile_l, nl_padded).

    tile_l is a multiple of the dtype's sublane packing (8 f32 / 16 bf16 /
    32 int8), capped so one input block stays <= max_block_bytes (keeps
    pipeline buffers + f32 temporaries a few MiB), and sized so the grid has
    ~target_steps steps for DMA/compute overlap and v7x dual-TC sharding.
    """
    mult = 8 * max(1, 4 // itemsize)                 # dtype-aware granularity
    rows_cap = (max_block_bytes // max(1, nr * itemsize)) // mult * mult
    rows_cap = max(mult, rows_cap)
    rows_steps = _round_up(max(1, (nl + target_steps - 1) // target_steps), mult)
    tile_l = max(mult, min(rows_cap, rows_steps))
    return tile_l, _round_up(nl, tile_l)


def clrnet_iou_loss(pred, target, *, loss_weight=1.0, lane_width=15 / 800):
    """Pallas implementation of CLRNetIoULoss.forward (pred/target: (Nl, Nr))."""
    assert pred.shape == target.shape, \
        "prediction and target must have the same shape!"
    nl, nr = pred.shape

    if pred.dtype != target.dtype:
        dt = jnp.promote_types(pred.dtype, target.dtype)
        pred, target = pred.astype(dt), target.astype(dt)

    itemsize = jnp.dtype(pred.dtype).itemsize
    nr_padded = _round_up(nr, 128)                   # full-width lane loads
    tile_l, nl_padded = _choose_tiling(nl, nr_padded, itemsize)

    pad_l, pad_r = nl_padded - nl, nr_padded - nr
    if pad_l or pad_r:
        # Padded entries get target = -1 (invalid) -> masked out exactly; the
        # final mean divides by the real nl below.
        pred = jnp.pad(pred, ((0, pad_l), (0, pad_r)))
        target = jnp.pad(target, ((0, pad_l), (0, pad_r)), constant_values=-1.0)

    grid = (nl_padded // tile_l,)

    cost = pl.CostEstimate(
        flops=7 * nl * nr, transcendentals=0,
        bytes_accessed=2 * nl * nr * itemsize + nl * 4)

    iou = pl.pallas_call(
        functools.partial(_iou_kernel, lane_width=lane_width),
        out_shape=jax.ShapeDtypeStruct((nl_padded, 1), jnp.float32),
        grid_spec=pltpu.PrefetchScalarGridSpec(
            num_scalar_prefetch=0,
            grid=grid,
            in_specs=[
                pl.BlockSpec((tile_l, nr_padded), lambda i: (i, 0)),
                pl.BlockSpec((tile_l, nr_padded), lambda i: (i, 0)),
            ],
            out_specs=pl.BlockSpec((tile_l, 1), lambda i: (i, 0)),
        ),
        compiler_params=pltpu.CompilerParams(
            dimension_semantics=("parallel",),
            vmem_limit_bytes=32 * 1024 * 1024,   # keep conservative for v7x
        ),
        cost_estimate=cost,
    )(pred, target)

    # Mean over the REAL nl lanes only (padded rows are sliced off).
    return (1.0 - iou[:nl, 0]).mean() * jnp.asarray(loss_weight, jnp.float32)


def _reference_loss(pred, target, loss_weight=1.0, lane_width=15 / 800):
    pred = pred.astype(jnp.float32)
    target = target.astype(jnp.float32)
    w = jnp.ones_like(target) * lane_width
    px1, px2 = pred - w, pred + w
    tx1, tx2 = target - w, target + w
    ovr = jnp.minimum(px2, tx2) - jnp.maximum(px1, tx1)
    union = jnp.maximum(px2, tx2) - jnp.minimum(px1, tx1)
    invalid = (target < 0) | (target >= 1.0)
    ovr = jnp.where(invalid, 0.0, ovr)
    union = jnp.where(invalid, 0.0, union)
    iou = ovr.sum(-1) / (union.sum(-1) + 1e-9)
    return (1.0 - iou).mean() * loss_weight


if __name__ == "__main__":
    key = jax.random.PRNGKey(0)
    k1, k2, k3, k4 = jax.random.split(key, 4)

    # Case 1: aligned small shapes (16 lanes x 128 rows).
    Nl, Nr = 16, 128
    pred = jax.random.uniform(k1, (Nl, Nr), jnp.float32, minval=-0.1, maxval=1.1)
    # target includes out-of-range values to exercise the invalid mask.
    target = jax.random.uniform(k2, (Nl, Nr), jnp.float32, minval=-0.2, maxval=1.2)
    loss = jax.block_until_ready(clrnet_iou_loss(pred, target))
    ref = _reference_loss(pred, target)
    assert jnp.allclose(loss, ref, rtol=1e-5, atol=1e-6), (loss, ref)

    # Case 2: unaligned, CLRNet-like shapes (10 lanes x 72 rows) -> exercises
    # the invalid-row / invalid-column padding path.
    Nl2, Nr2 = 10, 72
    pred2 = jax.random.uniform(k3, (Nl2, Nr2), jnp.float32, minval=-0.1, maxval=1.1)
    target2 = jax.random.uniform(k4, (Nl2, Nr2), jnp.float32, minval=-0.2, maxval=1.2)
    loss2 = jax.block_until_ready(clrnet_iou_loss(pred2, target2))
    ref2 = _reference_loss(pred2, target2)
    assert jnp.allclose(loss2, ref2, rtol=1e-5, atol=1e-6), (loss2, ref2)

    print("KERNEL_OK")
</pallas_src>

<mosaic_0001>
module attributes {stable_mosaic.version = 11 : i64} {
  func.func @_iou_kernel(%arg0: i32, %arg1: memref<8x128xf32, #tpu.memory_space<vmem>>, %arg2: memref<8x128xf32, #tpu.memory_space<vmem>>, %arg3: memref<8x1xf32, #tpu.memory_space<vmem>>) attributes {dimension_semantics = [#tpu.dimension_semantics<parallel>], iteration_bounds = array<i64: 2>, scalar_prefetch = 0 : i64, scratch_operands = 0 : i64, tpu.core_type = #tpu.core_type<tc>, window_params = [{transform_indices = @transform_0, window_bounds = array<i64: 8, 128>}, {transform_indices = @transform_1, window_bounds = array<i64: 8, 128>}, {transform_indices = @transform_2, window_bounds = array<i64: 8, 1>}]} {
    %c0 = arith.constant 0 : index
    %c0_0 = arith.constant 0 : index
    %0 = vector.load %arg1[%c0, %c0_0] : memref<8x128xf32, #tpu.memory_space<vmem>>, vector<8x128xf32>
    %c0_1 = arith.constant 0 : index
    %c0_2 = arith.constant 0 : index
    %1 = vector.load %arg2[%c0_1, %c0_2] : memref<8x128xf32, #tpu.memory_space<vmem>>, vector<8x128xf32>
    %2 = arith.subf %0, %1 : vector<8x128xf32>
    %3 = math.absf %2 : vector<8x128xf32>
    %cst = arith.constant 0.000000e+00 : f32
    %4 = vector.broadcast %cst : f32 to vector<8x128xf32>
    %5 = arith.cmpf oge, %1, %4 : vector<8x128xf32>
    %cst_3 = arith.constant 1.000000e+00 : f32
    %6 = vector.broadcast %cst_3 : f32 to vector<8x128xf32>
    %7 = arith.cmpf olt, %1, %6 : vector<8x128xf32>
    %8 = arith.andi %5, %7 : vector<8x128xi1>
    %9 = arith.extui %8 : vector<8x128xi1> to vector<8x128xi32>
    %10 = arith.sitofp %9 : vector<8x128xi32> to vector<8x128xf32>
    %11 = arith.mulf %3, %10 : vector<8x128xf32>
    %cst_4 = arith.constant dense<0.000000e+00> : vector<8xf32>
    %12 = vector.multi_reduction <add>, %11, %cst_4 [1] : vector<8x128xf32> to vector<8xf32>
    %13 = vector.shape_cast %12 : vector<8xf32> to vector<8x1xf32>
    %cst_5 = arith.constant dense<0.000000e+00> : vector<8xf32>
    %14 = vector.multi_reduction <add>, %10, %cst_5 [1] : vector<8x128xf32> to vector<8xf32>
    %15 = vector.shape_cast %14 : vector<8xf32> to vector<8x1xf32>
    %cst_6 = arith.constant 3.750000e-02 : f32
    %16 = vector.broadcast %cst_6 : f32 to vector<8x1xf32>
    %17 = arith.mulf %16, %15 : vector<8x1xf32>
    %18 = arith.subf %17, %13 : vector<8x1xf32>
    %cst_7 = arith.constant 3.750000e-02 : f32
    %19 = vector.broadcast %cst_7 : f32 to vector<8x1xf32>
    %20 = arith.mulf %19, %15 : vector<8x1xf32>
    %21 = arith.addf %20, %13 : vector<8x1xf32>
    %cst_8 = arith.constant 9.99999971E-10 : f32
    %22 = vector.broadcast %cst_8 : f32 to vector<8x1xf32>
    %23 = arith.addf %21, %22 : vector<8x1xf32>
    %24 = arith.divf %18, %23 : vector<8x1xf32>
    %c0_9 = arith.constant 0 : index
    %c0_10 = arith.constant 0 : index
    %25 = vector.load %arg3[%c0_9, %c0_10] : memref<8x1xf32, #tpu.memory_space<vmem>>, vector<8x1xf32>
    tpu.vector_store %arg3[%c0_9, %c0_10], %24 {strides = array<i32>} : memref<8x1xf32, #tpu.memory_space<vmem>>, vector<8x1xf32>,
    return
  }
  func.func @transform_0(%arg0: i32) -> (i32, i32) {
    %c0_i32 = arith.constant 0 : i32
    %c0_i32_0 = arith.constant 0 : i32
    return %arg0, %c0_i32 : i32, i32
  }
  func.func @transform_1(%arg0: i32) -> (i32, i32) {
    %c0_i32 = arith.constant 0 : i32
    %c0_i32_0 = arith.constant 0 : i32
    return %arg0, %c0_i32 : i32, i32
  }
  func.func @transform_2(%arg0: i32) -> (i32, i32) {
    %c0_i32 = arith.constant 0 : i32
    %c0_i32_0 = arith.constant 0 : i32
    return %arg0, %c0_i32 : i32, i32
  }
}

</mosaic_0001>

<llo_original>
// kernel: tpu_custom_call.1
$region0: #{tpu_custom_call.1}
  #allocation0 [shape = 'u32[]', space=smem, size = 0x4, offset = 0x4, fixed_abs, tag = 'smem constant byte address 0x4 - core index']
  #allocation1 [shape = 'u32[72,128]{1,0:T(1,128)}', space=vmem, size = 0x9000, scoped, tag = 'internal scratch']
  %s0 = inlined_call_operand.hbm [shape: f32[16,128], index: 0, kind: input, shape index: {}]
  %s1 = inlined_call_operand.hbm [shape: f32[16,128], index: 1, kind: input, shape index: {}]
  %s2 = inlined_call_operand.vmem [shape: f32[16,1], index: 2, kind: output, shape index: {}]
  %s3 = sld [smem:[#allocation0]]
  $region49: #{tpu_custom_call.1} parent=0
    _
  %s5 = ssub.s32 1, %s3
  %s6 = scalar_select 0, %s5, %s3
  $region1: #{tpu_custom_call.1} parent=0
    #allocation2 [shape = 'u8[8192]{0}', space=vmem, size = 0x2000, scoped, tag = 'input window, operand 0']
    #allocation3 [shape = 's32[2]{0}', space=sflag, size = 0x8, scoped, tag = 'scoped memory for tpu_custom_call.1']
    #allocation4 [shape = 'u8[8192]{0}', space=vmem, size = 0x2000, scoped, tag = 'input window, operand 1']
    #allocation5 [shape = 's32[2]{0}', space=sflag, size = 0x8, scoped, tag = 'scoped memory for tpu_custom_call.1']
    %7 = vsyncpa [#allocation3], 0
    %s8 = scalar_lea.sflag [#allocation3], 1
    %9 = vsyncpa %s8, 0
    %10 = vsyncpa [#allocation5], 0
    %s11 = scalar_lea.sflag [#allocation5], 1
    %12 = vsyncpa %s11, 0
    loop: start=0, step=1, limit=4
    $region2: #{tpu_custom_call.1} parent=1 // loop_pre_header
      _
    $region3: #{tpu_custom_call.1} parent=1 // loop_header
      %s14 = sphi 0, %s18
      %p15 = scmp.ge.s32.totalorder %s14, 4
      %s24 = sphi 0, %s26
      %s27 = sphi 0, %s24
      %s28 = sphi 0, %s27
      %s44 = sphi 0, %s28
      %s50 = sphi 0, %s52
      %s53 = sphi 0, %s50
      %s54 = sphi 0, %s53
      %s70 = sphi 0, %s54
      %s76 = sphi 0, %s78
      %s79 = sphi 0, %s76
      %s80 = sphi 0, %s79
      %s96 = sphi 0, %s80
    $region4: #{tpu_custom_call.1} parent=1 // loop_header_branch
      %17 = sbr.rel (%p15) target = $region8
    $region5: #{tpu_custom_call.1} parent=1 // loop_body
      %s19 = ssub.s32 %s14, 1
      %s20 = ssub.s32 %s14, 2
      %s21 = sadd.s32 %s14, 1
      %s22 = ssub.s32 %s14, %s21
      %p23 = scmp.eq.s32.totalorder %s22, 0
      %s25 = sadd.s32 %s24, 1
      %s26 = scalar_select %p23, %s24, %s25
      %p29 = pneg %p23
      %p30 = scmp.eq.s32.totalorder %s14, 1
      %p31 = por %p29, %p30
      %p32 = scmp.ne.s32.totalorder %s24, %s27
      %p33 = scmp.eq.s32.totalorder %s14, 0
      %p34 = por %p32, %p33
      %p35 = scmp.ne.s32.totalorder %s24, %s27
      %p36 = scmp.eq.s32.totalorder %s19, 1
      %p37 = por %p35, %p36
      %p38 = scmp.ne.s32.totalorder %s27, %s28
      %p39 = scmp.eq.s32.totalorder %s19, 0
      %p40 = por %p38, %p39
      %p41 = scmp.ne.s32.totalorder %s27, %s28
      %p42 = scmp.eq.s32.totalorder %s20, 1
      %p43 = por %p41, %p42
      %p45 = scmp.ne.s32.totalorder %s28, %s44
      %p46 = scmp.eq.s32.totalorder %s20, 0
      %p47 = por %p45, %p46
      %s48 = ssub.s32 %s14, %s21
      %p49 = scmp.eq.s32.totalorder %s48, 0
      %s51 = sadd.s32 %s50, 1
      %s52 = scalar_select %p49, %s50, %s51
      %p55 = pneg %p49
      %p56 = scmp.eq.s32.totalorder %s14, 1
      %p57 = por %p55, %p56
      %p58 = scmp.ne.s32.totalorder %s50, %s53
      %p59 = scmp.eq.s32.totalorder %s14, 0
      %p60 = por %p58, %p59
      %p61 = scmp.ne.s32.totalorder %s50, %s53
      %p62 = scmp.eq.s32.totalorder %s19, 1
      %p63 = por %p61, %p62
      %p64 = scmp.ne.s32.totalorder %s53, %s54
      %p65 = scmp.eq.s32.totalorder %s19, 0
      %p66 = por %p64, %p65
      %p67 = scmp.ne.s32.totalorder %s53, %s54
      %p68 = scmp.eq.s32.totalorder %s20, 1
      %p69 = por %p67, %p68
      %p71 = scmp.ne.s32.totalorder %s54, %s70
      %p72 = scmp.eq.s32.totalorder %s20, 0
      %p73 = por %p71, %p72
      %s74 = ssub.s32 %s14, %s21
      %p75 = scmp.eq.s32.totalorder %s74, 0
      %s77 = sadd.s32 %s76, 1
      %s78 = scalar_select %p75, %s76, %s77
      %p81 = pneg %p75
      %p82 = scmp.eq.s32.totalorder %s14, 1
      %p83 = por %p81, %p82
      %p84 = scmp.ne.s32.totalorder %s76, %s79
      %p85 = scmp.eq.s32.totalorder %s14, 0
      %p86 = por %p84, %p85
      %p87 = scmp.ne.s32.totalorder %s76, %s79
      %p88 = scmp.eq.s32.totalorder %s19, 1
      %p89 = por %p87, %p88
      %p90 = scmp.ne.s32.totalorder %s79, %s80
      %p91 = scmp.eq.s32.totalorder %s19, 0
      %p92 = por %p90, %p91
      %p93 = scmp.ne.s32.totalorder %s79, %s80
      %p94 = scmp.eq.s32.totalorder %s20, 1
      %p95 = por %p93, %p94
      %p97 = scmp.ne.s32.totalorder %s80, %s96
      %p98 = scmp.eq.s32.totalorder %s20, 0
      %p99 = por %p97, %p98
      %p100 = scmp.le.s32.totalorder 1, %s14
      %p101 = scmp.lt.s32.totalorder %s14, 3
      %p102 = pnand %p100, %p101
      %p103 = pneg %p102
      // Predicated region
      $region9: #{tpu_custom_call.1} parent=5 // pred_check
        _
      $region10: #{tpu_custom_call.1} parent=5 // pred_check_branch
        %105 = sbr.rel (%p102) target = $region12
      $region11: #{tpu_custom_call.1} parent=5 // pred_region
        %s106 = ssub.s32 %s14, 1
      $region12: #{tpu_custom_call.1} parent=5 // pred_fallthru
        _
      %p107 = scmp.lt.s32.totalorder %s14, 2
      // Predicated region
      $region13: #{tpu_custom_call.1} parent=5 // pred_check
        %p108 = pneg %p107
      $region14: #{tpu_custom_call.1} parent=5 // pred_check_branch
        %110 = sbr.rel (%p108) target = $region16
      $region15: #{tpu_custom_call.1} parent=5 // pred_region
        // Predicated region
        $region17: #{tpu_custom_call.1} parent=15 // pred_check
          %p111 = pneg %p34
        $region18: #{tpu_custom_call.1} parent=15 // pred_check_branch
          %113 = sbr.rel (%p111) target = $region20
        $region19: #{tpu_custom_call.1} parent=15 // pred_region
          %s114 = sand.u32 %s24, 1
          %s115 = scalar_lea.sflag [#allocation3], %s114
          %s116 = sand.u32 %s24, 1
          %s117 = smul.addr %s116, 8
          %s118 = scalar_lea.vmem [#allocation2], %s117
          %120 = vsyncadd %s115, 0
          %s121 = smul.addr %s14, 8
          %s122 = scalar_lea.hbm %s0, %s121
          %s124 = sshll.u32 %s122, 4
          %s125 = int_to_ptr.hbm [resolvable:$true] %s124
          %s126 = sshll.u32 %s118, 4
          %s127 = int_to_ptr.vmem [resolvable:$true] %s126
          %129 = dma.hbm_to_vmem [thread:$0]  %s125, 128, %s127, %s115
        $region20: #{tpu_custom_call.1} parent=15 // pred_fallthru
          _
        // Predicated region
        $region21: #{tpu_custom_call.1} parent=15 // pred_check
          %p130 = pneg %p60
        $region22: #{tpu_custom_call.1} parent=15 // pred_check_branch
          %132 = sbr.rel (%p130) target = $region24
        $region23: #{tpu_custom_call.1} parent=15 // pred_region
          %s133 = sand.u32 %s50, 1
          %s134 = scalar_lea.sflag [#allocation5], %s133
          %s135 = sand.u32 %s50, 1
          %s136 = smul.addr %s135, 8
          %s137 = scalar_lea.vmem [#allocation4], %s136
          %139 = vsyncadd %s134, 0
          %s140 = smul.addr %s14, 8
          %s141 = scalar_lea.hbm %s1, %s140
          %s143 = sshll.u32 %s141, 4
          %s144 = int_to_ptr.hbm [resolvable:$true] %s143
          %s145 = sshll.u32 %s137, 4
          %s146 = int_to_ptr.vmem [resolvable:$true] %s145
          %148 = dma.hbm_to_vmem [thread:$0]  %s144, 128, %s146, %s134
        $region24: #{tpu_custom_call.1} parent=15 // pred_fallthru
          _
      $region16: #{tpu_custom_call.1} parent=5 // pred_fallthru
        _
      %p149 = scmp.le.s32.totalorder 1, %s14
      %p150 = scmp.lt.s32.totalorder %s14, 3
      %p151 = pnand %p149, %p150
      %p152 = pneg %p151
      // Predicated region
      $region25: #{tpu_custom_call.1} parent=5 // pred_check
        _
      $region26: #{tpu_custom_call.1} parent=5 // pred_check_branch
        %154 = sbr.rel (%p151) target = $region28
      $region27: #{tpu_custom_call.1} parent=5 // pred_region
        %s155 = ssub.s32 %s14, 1
        %s156 = sand.u32 %s27, 1
        %s157 = scalar_lea.sflag [#allocation3], %s156
        %s158 = sand.u32 %s27, 1
        %s159 = smul.addr %s158, 8
        %s160 = scalar_lea.vmem [#allocation2], %s159
        // Predicated region
        $region29: #{tpu_custom_call.1} parent=27 // pred_check
          %p161 = pneg %p40
        $region30: #{tpu_custom_call.1} parent=27 // pred_check_branch
          %163 = sbr.rel (%p161) target = $region32
        $region31: #{tpu_custom_call.1} parent=27 // pred_region
          %165 = dma.done %s157, 128
        $region32: #{tpu_custom_call.1} parent=27 // pred_fallthru
          _
        %s166 = sand.u32 %s53, 1
        %s167 = scalar_lea.sflag [#allocation5], %s166
        %s168 = sand.u32 %s53, 1
        %s169 = smul.addr %s168, 8
        %s170 = scalar_lea.vmem [#allocation4], %s169
        // Predicated region
        $region33: #{tpu_custom_call.1} parent=27 // pred_check
          %p171 = pneg %p66
        $region34: #{tpu_custom_call.1} parent=27 // pred_check_branch
          %173 = sbr.rel (%p171) target = $region36
        $region35: #{tpu_custom_call.1} parent=27 // pred_region
          %175 = dma.done %s167, 128
        $region36: #{tpu_custom_call.1} parent=27 // pred_fallthru
          _
        %s176 = sand.u32 %s27, 1
        %s177 = scalar_lea.sflag [#allocation3], %s176
        %s178 = sand.u32 %s27, 1
        %s179 = smul.addr %s178, 8
        %s180 = scalar_lea.vmem [#allocation2], %s179
        %p181 = pneg %p40
        %p182 = pneg %p37
        %s183 = sand.u32 %s53, 1
        %s184 = scalar_lea.sflag [#allocation5], %s183
        %s185 = sand.u32 %s53, 1
        %s186 = smul.addr %s185, 8
        %s187 = scalar_lea.vmem [#allocation4], %s186
        %p188 = pneg %p66
        %p189 = pneg %p63
        %p190 = pneg %p92
        %p191 = pneg %p89
        %p192 = scmp.lt.s32.totalorder %s19, 1
        %s193 = scalar_select %p192, %s19, 1
        %s194 = smul.addr %s193, 8
        %s195 = scalar_lea.vmem %s2, %s194
        %p196 = scmp.lt.s32.totalorder %s19, 1
        %s197 = scalar_select %p196, %s19, 1
        %s198 = smul.addr %s197, 8
        %s199 = scalar_lea.vmem %s2, %s198
        %v200 = vld [vmem:[%s160] sm:$0xff]
        %v201 = vld [vmem:[%s170] sm:$0xff]
        %v202 = vsub.f32 %v200, %v201
        %v203 = vand.u32 2147483647, %v202
        %vm204 = vcmp.ge.f32.partialorder %v201, 0.0
        %vm205 = vcmp.lt.f32.partialorder %v201, 1.0
        %vm206 = vmand %vm204, %vm205
        %v207 = vsel %vm206, 1, 0
        %v208 = vcvt.s32.f32 %v207
        %v209 = vmul.f32 %v203, %v208
        %210 = vadd.xlane.f32.xlu0 %v209
        %v211 = vpop.xlane.xlu0 %210
        %212 = vadd.xlane.f32.xlu0 %v208
        %v213 = vpop.xlane.xlu0 %212
        %v214 = vmul.f32 %v213, 0.0375
        %v215 = vsub.f32 %v214, %v211
        %v216 = vadd.f32 %v214, %v211
        %v217 = vadd.f32 %v216, 1e-09
        %v218 = vrcp.pop %v217
        %v219 = vmul.f32 %v217, %v218
        %v220 = vsub.f32 1.0, %v219
        %v221 = vmul.f32 %v218, %v220
        %v222 = vadd.f32 %v218, %v221
        %vm223 = vweird.f32 %v217
        %vm224 = vweird.f32 %v218
        %vm225 = vmor %vm223, %vm224
        %v226 = vsel %vm225, %v218, %v222
        %v227 = vand.u32 2147483647, %v217
        %vm228 = vcmp.eq.f32.partialorder %v227, 8.507059e+37
        %v229 = vand.u32 %v217, 2147483648
        %v230 = vor.u32 1.1754944e-38, %v229
        %v231 = vsel %vm228, %v230, %v226
        %v232 = vmul.f32 %v215, %v231
        %vm233 = vcmask 7168
        %234 = vst.msk [vmem:[%s199] sm:$0xff] %vm233, %v232
        %p235 = scmp.lt.s32.totalorder %s19, 1
        %s236 = scalar_select %p235, %s19, 1
        %s237 = smul.addr %s236, 8
        %s238 = scalar_lea.vmem %s2, %s237
        // Predicated region
        $region37: #{tpu_custom_call.1} parent=27 // pred_check
          %p239 = pneg %p89
        $region38: #{tpu_custom_call.1} parent=27 // pred_check_branch
          %241 = sbr.rel (%p239) target = $region40
        $region39: #{tpu_custom_call.1} parent=27 // pred_region
          _
        $region40: #{tpu_custom_call.1} parent=27 // pred_fallthru
          _
      $region28: #{tpu_custom_call.1} parent=5 // pred_fallthru
        _
      %p242 = scmp.le.s32.totalorder 2, %s14
      // Predicated region
      $region41: #{tpu_custom_call.1} parent=5 // pred_check
        %p243 = pneg %p242
      $region42: #{tpu_custom_call.1} parent=5 // pred_check_branch
        %245 = sbr.rel (%p243) target = $region44
      $region43: #{tpu_custom_call.1} parent=5 // pred_region
        %s246 = ssub.s32 %s14, 2
        // Predicated region
        $region45: #{tpu_custom_call.1} parent=43 // pred_check
          %p247 = pneg %p95
        $region46: #{tpu_custom_call.1} parent=43 // pred_check_branch
          %249 = sbr.rel (%p247) target = $region48
        $region47: #{tpu_custom_call.1} parent=43 // pred_region
          %p250 = scmp.lt.s32.totalorder %s20, 1
          %s251 = scalar_select %p250, %s20, 1
          %s252 = smul.addr %s251, 8
          %s253 = scalar_lea.vmem %s2, %s252
        $region48: #{tpu_custom_call.1} parent=43 // pred_fallthru
          _
      $region44: #{tpu_custom_call.1} parent=5 // pred_fallthru
        _
    $region6: #{tpu_custom_call.1} parent=1 // loop_footer
      %s18 = sadd.s32 1, %s14
    $region7: #{tpu_custom_call.1} parent=1 // loop_footer_branch
      %13 = sbr.rel target = $region3
    $region8: #{tpu_custom_call.1} parent=1 // loop_exit
      _
    %254 = vsyncpa [#allocation3], 1
    %s255 = scalar_lea.sflag [#allocation3], 1
    %256 = vsyncpa %s255, 1
    %257 = vsyncpa [#allocation5], 1
    %s258 = scalar_lea.sflag [#allocation5], 1
    %259 = vsyncpa %s258, 1

</llo_original>
